<compile_context>
chip_gen: v5e
topology: v5e:2x2
jax: 0.10.0
libtpu: 0.0.40
codegen_flags: <defaults>
</compile_context>

<pallas_src>
import math
from functools import partial

import jax
import jax.numpy as jnp
from jax import lax
from jax.experimental import pallas as pl
from jax.experimental.pallas import tpu as pltpu


def build_fixed_embedding_table(c_in: int, d_model: int) -> jnp.ndarray:
    """Deterministic sinusoidal table, identical to the PyTorch __init__."""
    position = jnp.arange(0, c_in, dtype=jnp.float32)[:, None]               # (c_in, 1)
    div_term = jnp.exp(
        jnp.arange(0, d_model, 2, dtype=jnp.float32) * -(math.log(10000.0) / d_model)
    )                                                                        # (ceil(d/2),)
    angles = position * div_term                                             # (c_in, ceil(d/2))
    w = jnp.zeros((c_in, d_model), dtype=jnp.float32)
    w = w.at[:, 0::2].set(jnp.sin(angles))
    w = w.at[:, 1::2].set(jnp.cos(angles)[:, : d_model // 2])                # odd d_model safe
    return w


def _embed_kernel(idx_ref, table_ref, out_ref, *, kpack, c_in_pad):
    # idx_ref:   (1, kpack, C) int32 ; idx_ref[0, c, j] selects the table row whose
    #            embedding lands in out_ref[j, c*d_model:(c+1)*d_model]
    # table_ref: (kpack*c_in_pad, kpack*d_model) f32 ; block-diagonal table (tiny)
    # out_ref:   (C, kpack*d_model) f32 ; lane-dense packed output tile
    ids = idx_ref[0]                                        # (kpack, C) int32
    C = out_ref.shape[0]

    # Per-slot one-hots stacked along the contraction (sublane) axis form the selector
    # for the block-diagonal table: onehot[c*c_in_pad + v, j] = (ids[c, j] == v).
    # Out-of-range / negative ids never match -> zero output rows.
    block_iota = lax.broadcasted_iota(jnp.int32, (c_in_pad, C), 0)
    parts = [(block_iota == ids[c:c + 1, :]).astype(jnp.float32) for c in range(kpack)]
    onehot = parts[0] if kpack == 1 else jnp.concatenate(parts, axis=0)     # (K, C)

    # ONE trans-A MXU matmul + ONE full-width (128-lane) store per tile:
    #   (K, C)^T @ (K, kpack*d_model) -> (C, kpack*d_model).
    # HIGHEST precision keeps the f32 table operand exact (an exact one-hot does not
    # protect the table operand from bf16 rounding under DEFAULT precision).
    out_ref[...] = lax.dot_general(
        onehot,
        table_ref[...],
        dimension_numbers=(((0,), (0,)), ((), ())),
        preferred_element_type=jnp.float32,
        precision=lax.Precision.HIGHEST,
    )


def fixed_embedding_forward(x: jnp.ndarray, table: jnp.ndarray, *,
                            max_out_tile_bytes: int = 4 * 1024 * 1024) -> jnp.ndarray:
    """x: integer indices of shape (...,); returns (..., d_model) float32."""
    c_in, d_model = table.shape
    orig_shape = x.shape
    flat = x.reshape(-1).astype(jnp.int32)
    n = flat.shape[0]

    # Lane-packing factor: how many d_model-wide rows fill one 128-lane output row.
    kpack = 128 // d_model if (d_model < 128 and 128 % d_model == 0) else 1
    # TODO(synk): d_model < 128 that does not divide 128 (e.g. 24, 48) falls back to
    # kpack=1 -> masked partial stores; add a padded-lane variant if such d_model occurs.
    align = 8 * kpack            # keeps the out-block sublane dim a multiple of 8

    def round_up(a, m):
        return ((a + m - 1) // m) * m

    # Tile size: target ~max_out_tile_bytes of output writeback per grid step (keeps the
    # ~0.35us/step pipeline overhead <~10% on v5e/v6e/v7x), but clamp so large inputs get
    # at least 2 tiles so both v7x TensorCores can be used via the "parallel" grid axis.
    tn_cap = max(align, (max_out_tile_bytes // (4 * d_model)) // align * align)
    tn = min(tn_cap, round_up(max(1, -(-n // 2)), align))   # indices per grid step
    n_pad = round_up(max(n, 1), tn)
    n_tiles = n_pad // tn
    C = tn // kpack

    if n_pad != n:
        flat = jnp.pad(flat, (0, n_pad - n))                # padded ids = 0 (sliced off below)

    # Vocab rows padded to a sublane multiple; extra rows are zero and unreachable in-range.
    c_in_pad = round_up(c_in, 8)
    table_p = jnp.pad(table.astype(jnp.float32), ((0, c_in_pad - c_in), (0, 0)))
    # Block-diagonal table so all kpack packed slots are gathered by a single matmul.
    big_table = table_p if kpack == 1 else jnp.kron(jnp.eye(kpack, dtype=jnp.float32), table_p)

    # idx_arr[i, c, j] = flat[(i*C + j)*kpack + c]  (lane-major per tile; 4 B/index, ~3% of
    # output bytes at d_model=32 -- cheap relative to the output writeback).
    idx_arr = flat.reshape(n_tiles, C, kpack).transpose(0, 2, 1)

    out_packed = pl.pallas_call(
        partial(_embed_kernel, kpack=kpack, c_in_pad=c_in_pad),
        out_shape=jax.ShapeDtypeStruct((n_pad // kpack, kpack * d_model), jnp.float32),
        grid_spec=pltpu.PrefetchScalarGridSpec(
            num_scalar_prefetch=0,
            grid=(n_tiles,),
            in_specs=[
                pl.BlockSpec((1, kpack, C), lambda i: (i, 0, 0)),                     # index tile
                pl.BlockSpec((kpack * c_in_pad, kpack * d_model), lambda i: (0, 0)),  # full table
            ],
            out_specs=pl.BlockSpec((C, kpack * d_model), lambda i: (i, 0)),
        ),
        compiler_params=pltpu.CompilerParams(
            dimension_semantics=("parallel",),
            vmem_limit_bytes=48 * 1024 * 1024,   # headroom for 4 MiB double-buffered outputs
        ),
    )(idx_arr, big_table)

    # Free row-major reshape undoes the lane packing; slice off index padding.
    out = out_packed.reshape(n_pad, d_model)[:n]
    return out.reshape(*orig_shape, d_model)


if __name__ == "__main__":
    c_in, d_model = 13, 32          # e.g. month embedding in the TFT temporal stack
    B, S = 2, 8

    table = build_fixed_embedding_table(c_in, d_model)
    key = jax.random.PRNGKey(0)

    # Primary small check (single tile).
    x = jax.random.randint(key, (B, S), 0, c_in, dtype=jnp.int32)
    out = jax.block_until_ready(fixed_embedding_forward(x, table))
    ref = table[x]
    assert out.shape == (B, S, d_model)
    assert jnp.allclose(out, ref, atol=1e-5), "mismatch vs reference gather (small)"

    # Secondary check exercising multi-tile grid + tail padding + lane packing.
    x2 = jax.random.randint(jax.random.PRNGKey(1), (5, 2000), 0, c_in, dtype=jnp.int32)
    out2 = jax.block_until_ready(fixed_embedding_forward(x2, table))
    assert out2.shape == (5, 2000, d_model)
    assert jnp.allclose(out2, table[x2], atol=1e-5), "mismatch vs reference gather (large)"

    print("KERNEL_OK")
</pallas_src>

<mosaic_0001>
module attributes {stable_mosaic.version = 11 : i64} {
  func.func @_embed_kernel(%arg0: i32, %arg1: memref<1x4x8xi32, #tpu.memory_space<vmem>>, %arg2: memref<64x128xf32, #tpu.memory_space<vmem>>, %arg3: memref<8x128xf32, #tpu.memory_space<vmem>>) attributes {dimension_semantics = [#tpu.dimension_semantics<parallel>], iteration_bounds = array<i64: 1>, scalar_prefetch = 0 : i64, scratch_operands = 0 : i64, tpu.core_type = #tpu.core_type<tc>, window_params = [{transform_indices = @transform_0, window_bounds = array<i64: 1, 4, 8>}, {pipeline_mode = #tpu.pipeline_mode<synchronous>, transform_indices = @transform_1, window_bounds = array<i64: 64, 128>}, {transform_indices = @transform_2, window_bounds = array<i64: 8, 128>}]} {
    %c0 = arith.constant 0 : index
    %c0_0 = arith.constant 0 : index
    %c0_1 = arith.constant 0 : index
    %0 = vector.load %arg1[%c0, %c0_0, %c0_1] : memref<1x4x8xi32, #tpu.memory_space<vmem>>, vector<1x4x8xi32>
    %1 = vector.shape_cast %0 : vector<1x4x8xi32> to vector<4x8xi32>
    %2 = tpu.iota {dimensions = array<i32: 0>} : vector<16x8xi32>
    %3 = vector.extract_strided_slice %1 {offsets = [0, 0], sizes = [1, 8], strides = [1, 1]} : vector<4x8xi32> to vector<1x8xi32>
    %4 = vector.broadcast %3 : vector<1x8xi32> to vector<16x8xi32>
    %5 = arith.cmpi eq, %2, %4 : vector<16x8xi32>
    %6 = arith.extui %5 : vector<16x8xi1> to vector<16x8xi32>
    %7 = arith.sitofp %6 : vector<16x8xi32> to vector<16x8xf32>
    %8 = vector.extract_strided_slice %1 {offsets = [1, 0], sizes = [1, 8], strides = [1, 1]} : vector<4x8xi32> to vector<1x8xi32>
    %9 = vector.broadcast %8 : vector<1x8xi32> to vector<16x8xi32>
    %10 = arith.cmpi eq, %2, %9 : vector<16x8xi32>
    %11 = arith.extui %10 : vector<16x8xi1> to vector<16x8xi32>
    %12 = arith.sitofp %11 : vector<16x8xi32> to vector<16x8xf32>
    %13 = vector.extract_strided_slice %1 {offsets = [2, 0], sizes = [1, 8], strides = [1, 1]} : vector<4x8xi32> to vector<1x8xi32>
    %14 = vector.broadcast %13 : vector<1x8xi32> to vector<16x8xi32>
    %15 = arith.cmpi eq, %2, %14 : vector<16x8xi32>
    %16 = arith.extui %15 : vector<16x8xi1> to vector<16x8xi32>
    %17 = arith.sitofp %16 : vector<16x8xi32> to vector<16x8xf32>
    %18 = vector.extract_strided_slice %1 {offsets = [3, 0], sizes = [1, 8], strides = [1, 1]} : vector<4x8xi32> to vector<1x8xi32>
    %19 = vector.broadcast %18 : vector<1x8xi32> to vector<16x8xi32>
    %20 = arith.cmpi eq, %2, %19 : vector<16x8xi32>
    %21 = arith.extui %20 : vector<16x8xi1> to vector<16x8xi32>
    %22 = arith.sitofp %21 : vector<16x8xi32> to vector<16x8xf32>
    %23 = tpu.concatenate %7, %12, %17, %22 in 0 : vector<16x8xf32>, vector<16x8xf32>, vector<16x8xf32>, vector<16x8xf32> -> vector<64x8xf32>
    %c0_2 = arith.constant 0 : index
    %c0_3 = arith.constant 0 : index
    %24 = vector.load %arg2[%c0_2, %c0_3] : memref<64x128xf32, #tpu.memory_space<vmem>>, vector<64x128xf32>
    %cst = arith.constant dense<0.000000e+00> : vector<8x128xf32>
    %25 = tpu.matmul %23, %24, %cst {dimension_numbers = #tpu.dot_dimension_numbers<[0], [0], [1], [1], [0, 1, 1, 1], [], []>, precision = #tpu.contract_precision<fp32>} : vector<64x8xf32>, vector<64x128xf32>, vector<8x128xf32> -> vector<8x128xf32>
    %c0_4 = arith.constant 0 : index
    %c0_5 = arith.constant 0 : index
    %26 = vector.load %arg3[%c0_4, %c0_5] : memref<8x128xf32, #tpu.memory_space<vmem>>, vector<8x128xf32>
    tpu.vector_store %arg3[%c0_4, %c0_5], %25 {strides = array<i32>} : memref<8x128xf32, #tpu.memory_space<vmem>>, vector<8x128xf32>,
    return
  }
  func.func @transform_0(%arg0: i32) -> (i32, i32, i32) {
    %c0_i32 = arith.constant 0 : i32
    %c0_i32_0 = arith.constant 0 : i32
    %c0_i32_1 = arith.constant 0 : i32
    return %arg0, %c0_i32, %c0_i32_0 : i32, i32, i32
  }
  func.func @transform_1(%arg0: i32) -> (i32, i32) {
    %c0_i32 = arith.constant 0 : i32
    %c0_i32_0 = arith.constant 0 : i32
    %c0_i32_1 = arith.constant 0 : i32
    return %c0_i32, %c0_i32_0 : i32, i32
  }
  func.func @transform_2(%arg0: i32) -> (i32, i32) {
    %c0_i32 = arith.constant 0 : i32
    %c0_i32_0 = arith.constant 0 : i32
    return %arg0, %c0_i32 : i32, i32
  }
}

</mosaic_0001>

<llo_original>
// kernel: tpu_custom_call.1
$region0: #{tpu_custom_call.1}
  #allocation0 [shape = 'u32[]', space=smem, size = 0x4, offset = 0x4, fixed_abs, tag = 'smem constant byte address 0x4 - core index']
  #allocation1 [shape = 'u32[72,128]{1,0:T(1,128)}', space=vmem, size = 0x9000, scoped, tag = 'internal scratch']
  %s0 = inlined_call_operand.hbm [shape: s32[1,4,8], index: 0, kind: input, shape index: {}]
  %s1 = inlined_call_operand.hbm [shape: f32[64,128], index: 1, kind: input, shape index: {}]
  %s2 = inlined_call_operand.hbm [shape: f32[8,128], index: 2, kind: output, shape index: {}]
  %s3 = sld [smem:[#allocation0]]
  $region26: #{tpu_custom_call.1} parent=0
    _
  %s5 = ssub.s32 1, %s3
  %s6 = scalar_select 0, %s5, %s3
  $region1: #{tpu_custom_call.1} parent=0
    #allocation2 [shape = 'u8[2048]{0}', space=vmem, size = 0x800, scoped, tag = 'input window, operand 0, single buffered']
    #allocation3 [shape = 's32[1]{0}', space=sflag, size = 0x4, scoped, tag = 'scoped memory for tpu_custom_call.1']
    #allocation4 [shape = 's32[1]{0}', space=sflag, size = 0x4, scoped, tag = 'scoped memory for tpu_custom_call.1']
    #allocation5 [shape = 'u8[32768]{0}', space=vmem, size = 0x8000, scoped, tag = 'input window, operand 1, single buffered']
    #allocation6 [shape = 's32[1]{0}', space=sflag, size = 0x4, scoped, tag = 'scoped memory for tpu_custom_call.1']
    #allocation7 [shape = 'u8[4096]{0}', space=vmem, size = 0x1000, scoped, tag = 'output window, operand 0, single buffered']
    %7 = vsyncpa [#allocation3], 0
    %8 = vsyncpa [#allocation6], 0
    %9 = vsyncpa [#allocation4], 0
    // Predicated region
    $region2: #{tpu_custom_call.1} parent=1 // pred_check
      _
    $region3: #{tpu_custom_call.1} parent=1 // pred_check_branch
      %11 = sbr.rel (0) target = $region5
    $region4: #{tpu_custom_call.1} parent=1 // pred_region
      %13 = vsyncadd [#allocation3], 0
      %s15 = sshll.u32 %s0, 4
      %s16 = int_to_ptr.hbm [resolvable:$true] %s15
      %s17 = sshll.u32 [#allocation2], 4
      %s18 = int_to_ptr.vmem [resolvable:$true] %s17
      %20 = dma.hbm_to_vmem [thread:$0]  %s16, 64, %s18, [#allocation3]
    $region5: #{tpu_custom_call.1} parent=1 // pred_fallthru
      _
    // Predicated region
    $region6: #{tpu_custom_call.1} parent=1 // pred_check
      _
    $region7: #{tpu_custom_call.1} parent=1 // pred_check_branch
      %22 = sbr.rel (0) target = $region9
    $region8: #{tpu_custom_call.1} parent=1 // pred_region
      %24 = vsyncadd [#allocation6], 0
      %s25 = sshll.u32 %s1, 4
      %s26 = int_to_ptr.hbm [resolvable:$true] %s25
      %s27 = sshll.u32 [#allocation5], 4
      %s28 = int_to_ptr.vmem [resolvable:$true] %s27
      %33 = dma.hbm_to_vmem [thread:$0]  %s26, 1024, %s28, [#allocation6], 128, 128, 8
    $region9: #{tpu_custom_call.1} parent=1 // pred_fallthru
      _
    // Predicated region
    $region10: #{tpu_custom_call.1} parent=1 // pred_check
      _
    $region11: #{tpu_custom_call.1} parent=1 // pred_check_branch
      %35 = sbr.rel (0) target = $region13
    $region12: #{tpu_custom_call.1} parent=1 // pred_region
      %37 = dma.done [#allocation3], 64
    $region13: #{tpu_custom_call.1} parent=1 // pred_fallthru
      _
    // Predicated region
    $region14: #{tpu_custom_call.1} parent=1 // pred_check
      _
    $region15: #{tpu_custom_call.1} parent=1 // pred_check_branch
      %39 = sbr.rel (0) target = $region17
    $region16: #{tpu_custom_call.1} parent=1 // pred_region
      %41 = dma.done [#allocation6], 1024
    $region17: #{tpu_custom_call.1} parent=1 // pred_fallthru
      _
    %v42 = vld [vmem:[#allocation2] sm:$0xf]
    %v43 = vlaneseq
    %v44 = vshrl.u32 %v43, 7
    %v45 = vadd.s32 %v44, 8
    %v46 = vperm.slane %v42, 0
    %vm47 = vcmp.eq.s32.totalorder %v44, %v46
    %vm48 = vcmp.eq.s32.totalorder %v45, %v46
    %v49 = vsel %vm47, 1, 0
    %v50 = vsel %vm48, 1, 0
    %v51 = vcvt.s32.f32 %v49
    %v52 = vcvt.s32.f32 %v50
    %v53 = vperm.slane %v42, 1
    %vm54 = vcmp.eq.s32.totalorder %v44, %v53
    %vm55 = vcmp.eq.s32.totalorder %v45, %v53
    %v56 = vsel %vm54, 1, 0
    %v57 = vsel %vm55, 1, 0
    %v58 = vcvt.s32.f32 %v56
    %v59 = vcvt.s32.f32 %v57
    %v60 = vperm.slane %v42, 2
    %vm61 = vcmp.eq.s32.totalorder %v44, %v60
    %vm62 = vcmp.eq.s32.totalorder %v45, %v60
    %v63 = vsel %vm61, 1, 0
    %v64 = vsel %vm62, 1, 0
    %v65 = vcvt.s32.f32 %v63
    %v66 = vcvt.s32.f32 %v64
    %v67 = vperm.slane %v42, 3
    %vm68 = vcmp.eq.s32.totalorder %v44, %v67
    %vm69 = vcmp.eq.s32.totalorder %v45, %v67
    %v70 = vsel %vm68, 1, 0
    %v71 = vsel %vm69, 1, 0
    %v72 = vcvt.s32.f32 %v70
    %v73 = vcvt.s32.f32 %v71
    %v74 = vld [vmem:[#allocation5] sm:$0xff]
    %v75 = vld [vmem:[#allocation5 + $0x8] sm:$0xff]
    %v76 = vld [vmem:[#allocation5 + $0x10] sm:$0xff]
    %v77 = vld [vmem:[#allocation5 + $0x18] sm:$0xff]
    %v78 = vld [vmem:[#allocation5 + $0x20] sm:$0xff]
    %v79 = vld [vmem:[#allocation5 + $0x28] sm:$0xff]
    %v80 = vld [vmem:[#allocation5 + $0x30] sm:$0xff]
    %v81 = vld [vmem:[#allocation5 + $0x38] sm:$0xff]
    %82 = vxpose.xlu0.b32.start [1/16] %v51, 128
    %83 = vxpose.xlu0.b32.cont [2/16] %v52, 128
    %84 = vxpose.xlu0.b32.cont [3/16] %v58, 128
    %85 = vxpose.xlu0.b32.cont [4/16] %v59, 128
    %86 = vxpose.xlu0.b32.cont [5/16] %v65, 128
    %87 = vxpose.xlu0.b32.cont [6/16] %v66, 128
    %88 = vxpose.xlu0.b32.cont [7/16] %v72, 128
    %89 = vxpose.xlu0.b32.cont [8/16] %v73, 128
    %90 = vxpose.xlu0.b32.cont [9/16] 0.0, 128
    %91 = vxpose.xlu0.b32.cont [10/16] 0.0, 128
    %92 = vxpose.xlu0.b32.cont [11/16] 0.0, 128
    %93 = vxpose.xlu0.b32.cont [12/16] 0.0, 128
    %94 = vxpose.xlu0.b32.cont [13/16] 0.0, 128
    %95 = vxpose.xlu0.b32.cont [14/16] 0.0, 128
    %96 = vxpose.xlu0.b32.cont [15/16] 0.0, 128
    %97 = vxpose.xlu0.b32.end [16/16] 0.0, 128
    %v98 = vpop.trf.xlu0
    %v99 = vpop.trf.xlu0
    %v100 = vpop.trf.xlu0
    %v101 = vpop.trf.xlu0
    %v102 = vpop.trf.xlu0
    %v103 = vpop.trf.xlu0
    %v104 = vpop.trf.xlu0
    %v105 = vpop.trf.xlu0
    %v106 = vpop.trf.xlu0
    %v107 = vpop.trf.xlu0
    %v108 = vpop.trf.xlu0
    %v109 = vpop.trf.xlu0
    %v110 = vpop.trf.xlu0
    %v111 = vpop.trf.xlu0
    %v112 = vpop.trf.xlu0
    %v113 = vpop.trf.xlu0
    %vm114 = vcmask 523264
    %v116 = vsel %vm114, %v98, 0
    %118 = vmatpush.msra.mxu0 0.0
    %119 = vmatpush.msra.mxu0 0.0
    %120 = vmatpush.msra.mxu0 0.0
    %121 = vmatpush.msra.mxu0 0.0
    %122 = vmatpush.msra.mxu0 0.0
    %123 = vmatpush.msra.mxu0 0.0
    %124 = vmatpush.msra.mxu0 0.0
    %125 = vmatpush.msra.mxu0 0.0
    %v126 = vand.u32 %v81, 4294901760
    %127 = vmatpush.msra.mxu0 %v126
    %v128 = vand.u32 %v80, 4294901760
    %129 = vmatpush.msra.mxu0 %v128
    %v130 = vand.u32 %v79, 4294901760
    %131 = vmatpush.msra.mxu0 %v130
    %v132 = vand.u32 %v78, 4294901760
    %133 = vmatpush.msra.mxu0 %v132
    %v134 = vand.u32 %v77, 4294901760
    %135 = vmatpush.msra.mxu0 %v134
    %v136 = vand.u32 %v76, 4294901760
    %137 = vmatpush.msra.mxu0 %v136
    %v138 = vand.u32 %v75, 4294901760
    %139 = vmatpush.msra.mxu0 %v138
    %v140 = vand.u32 %v74, 4294901760
    %141 = vmatpush.msra.mxu0 %v140
    %v142 = vand.u32 %v116, 4294901760
    %v143 = vsub.f32 %v116, %v142
    %v144 = vand.u32 %v143, 4294901760
    %v145 = vsub.f32 %v143, %v144
    %v146 = vand.u32 %v145, 4294901760
    %147 = vmatmul.f32.gmra.mxu0 %v146
    %v148 = vpop.f32.mrf.mxu0
    %v149 = vadd.f32 0.0, %v148
    %150 = vdwg.mxu0
    %151 = vmatpush.msra.mxu0 0.0
    %152 = vmatpush.msra.mxu0 0.0
    %153 = vmatpush.msra.mxu0 0.0
    %154 = vmatpush.msra.mxu0 0.0
    %155 = vmatpush.msra.mxu0 0.0
    %156 = vmatpush.msra.mxu0 0.0
    %157 = vmatpush.msra.mxu0 0.0
    %158 = vmatpush.msra.mxu0 0.0
    %v159 = vand.u32 %v81, 4294901760
    %v160 = vsub.f32 %v81, %v159
    %v161 = vand.u32 %v160, 4294901760
    %v162 = vsub.f32 %v160, %v161
    %v163 = vand.u32 %v162, 4294901760
    %164 = vmatpush.msra.mxu0 %v163
    %v165 = vand.u32 %v80, 4294901760
    %v166 = vsub.f32 %v80, %v165
    %v167 = vand.u32 %v166, 4294901760
    %v168 = vsub.f32 %v166, %v167
    %v169 = vand.u32 %v168, 4294901760
    %170 = vmatpush.msra.mxu0 %v169
    %v171 = vand.u32 %v79, 4294901760
    %v172 = vsub.f32 %v79, %v171
    %v173 = vand.u32 %v172, 4294901760
    %v174 = vsub.f32 %v172, %v173
    %v175 = vand.u32 %v174, 4294901760
    %176 = vmatpush.msra.mxu0 %v175
    %v177 = vand.u32 %v78, 4294901760
    %v178 = vsub.f32 %v78, %v177
    %v179 = vand.u32 %v178, 4294901760
    %v180 = vsub.f32 %v178, %v179
    %v181 = vand.u32 %v180, 4294901760
    %182 = vmatpush.msra.mxu0 %v181
    %v183 = vand.u32 %v77, 4294901760
    %v184 = vsub.f32 %v77, %v183
    %v185 = vand.u32 %v184, 4294901760
    %v186 = vsub.f32 %v184, %v185
    %v187 = vand.u32 %v186, 4294901760
    %188 = vmatpush.msra.mxu0 %v187
    %v189 = vand.u32 %v76, 4294901760
    %v190 = vsub.f32 %v76, %v189
    %v191 = vand.u32 %v190, 4294901760
    %v192 = vsub.f32 %v190, %v191
    %v193 = vand.u32 %v192, 4294901760
    %194 = vmatpush.msra.mxu0 %v193
    %v195 = vand.u32 %v75, 4294901760
    %v196 = vsub.f32 %v75, %v195
    %v197 = vand.u32 %v196, 4294901760
    %v198 = vsub.f32 %v196, %v197
    %v199 = vand.u32 %v198, 4294901760
    %200 = vmatpush.msra.mxu0 %v199
    %v201 = vand.u32 %v74, 4294901760
    %v202 = vsub.f32 %v74, %v201
    %v203 = vand.u32 %v202, 4294901760
    %v204 = vsub.f32 %v202, %v203
    %v205 = vand.u32 %v204, 4294901760
    %206 = vmatpush.msra.mxu0 %v205
    %v207 = vand.u32 %v116, 4294901760
    %208 = vmatmul.f32.gmra.mxu0 %v207
    %v209 = vpop.f32.mrf.mxu0
    %v210 = vadd.f32 %v149, %v209
    %211 = vdwg.mxu0
    %212 = vmatpush.msra.mxu0 0.0
    %213 = vmatpush.msra.mxu0 0.0
    %214 = vmatpush.msra.mxu0 0.0
    %215 = vmatpush.msra.mxu0 0.0
    %216 = vmatpush.msra.mxu0 0.0
    %217 = vmatpush.msra.mxu0 0.0
    %218 = vmatpush.msra.mxu0 0.0
    %219 = vmatpush.msra.mxu0 0.0
    %v220 = vand.u32 %v81, 4294901760
    %v221 = vsub.f32 %v81, %v220
    %222 = vmatpush.msra.mxu0 %v221
    %v223 = vand.u32 %v80, 4294901760
    %v224 = vsub.f32 %v80, %v223
    %225 = vmatpush.msra.mxu0 %v224
    %v226 = vand.u32 %v79, 4294901760
    %v227 = vsub.f32 %v79, %v226
    %228 = vmatpush.msra.mxu0 %v227
    %v229 = vand.u32 %v78, 4294901760
    %v230 = vsub.f32 %v78, %v229
    %231 = vmatpush.msra.mxu0 %v230
    %v232 = vand.u32 %v77, 4294901760
    %v233 = vsub.f32 %v77, %v232
    %234 = vmatpush.msra.mxu0 %v233
    %v235 = vand.u32 %v76, 4294901760
    %v236 = vsub.f32 %v76, %v235
    %237 = vmatpush.msra.mxu0 %v236
    %v238 = vand.u32 %v75, 4294901760
    %v239 = vsub.f32 %v75, %v238
    %240 = vmatpush.msra.mxu0 %v239
    %v241 = vand.u32 %v74, 4294901760
    %v242 = vsub.f32 %v74, %v241
    %243 = vmatpush.msra.mxu0 %v242
    %v244 = vand.u32 %v116, 4294901760
    %v245 = vsub.f32 %v116, %v244
    %246 = vmatmul.f32.gmra.mxu0 %v245
    %v247 = vpop.f32.mrf.mxu0
    %v248 = vadd.f32 %v210, %v247
    %249 = vdwg.mxu0
    %250 = vmatpush.msra.mxu0 0.0
    %251 = vmatpush.msra.mxu0 0.0
    %252 = vmatpush.msra.mxu0 0.0
    %253 = vmatpush.msra.mxu0 0.0
    %254 = vmatpush.msra.mxu0 0.0
    %255 = vmatpush.msra.mxu0 0.0
    %256 = vmatpush.msra.mxu0 0.0
    %257 = vmatpush.msra.mxu0 0.0
    %v258 = vand.u32 %v81, 4294901760
    %259 = vmatpush.msra.mxu0 %v258
    %v260 = vand.u32 %v80, 4294901760
    %261 = vmatpush.msra.mxu0 %v260
    %v262 = vand.u32 %v79, 4294901760
    %263 = vmatpush.msra.mxu0 %v262
    %v264 = vand.u32 %v78, 4294901760
    %265 = vmatpush.msra.mxu0 %v264
    %v266 = vand.u32 %v77, 4294901760
    %267 = vmatpush.msra.mxu0 %v266
    %v268 = vand.u32 %v76, 4294901760
    %269 = vmatpush.msra.mxu0 %v268
    %v270 = vand.u32 %v75, 4294901760
    %271 = vmatpush.msra.mxu0 %v270
    %v272 = vand.u32 %v74, 4294901760
    %273 = vmatpush.msra.mxu0 %v272
    %v274 = vand.u32 %v116, 4294901760
    %v275 = vsub.f32 %v116, %v274
    %v276 = vand.u32 %v275, 4294901760
    %277 = vmatmul.f32.gmra.mxu0 %v276
    %v278 = vpop.f32.mrf.mxu0
    %v279 = vadd.f32 %v248, %v278
    %280 = vdwg.mxu0
    %281 = vmatpush.msra.mxu0 0.0
    %282 = vmatpush.msra.mxu0 0.0
    %283 = vmatpush.msra.mxu0 0.0
    %284 = vmatpush.msra.mxu0 0.0
    %285 = vmatpush.msra.mxu0 0.0
    %286 = vmatpush.msra.mxu0 0.0
    %287 = vmatpush.msra.mxu0 0.0
    %288 = vmatpush.msra.mxu0 0.0
    %v289 = vand.u32 %v81, 4294901760
    %v290 = vsub.f32 %v81, %v289
    %v291 = vand.u32 %v290, 4294901760
    %292 = vmatpush.msra.mxu0 %v291
    %v293 = vand.u32 %v80, 4294901760
    %v294 = vsub.f32 %v80, %v293
    %v295 = vand.u32 %v294, 4294901760
    %296 = vmatpush.msra.mxu0 %v295
    %v297 = vand.u32 %v79, 4294901760
    %v298 = vsub.f32 %v79, %v297
    %v299 = vand.u32 %v298, 4294901760
    %300 = vmatpush.msra.mxu0 %v299
    %v301 = vand.u32 %v78, 4294901760
    %v302 = vsub.f32 %v78, %v301
    %v303 = vand.u32 %v302, 4294901760
    %304 = vmatpush.msra.mxu0 %v303
    %v305 = vand.u32 %v77, 4294901760
    %v306 = vsub.f32 %v77, %v305
    %v307 = vand.u32 %v306, 4294901760
    %308 = vmatpush.msra.mxu0 %v307
    %v309 = vand.u32 %v76, 4294901760
    %v310 = vsub.f32 %v76, %v309
    %v311 = vand.u32 %v310, 4294901760
    %312 = vmatpush.msra.mxu0 %v311
    %v313 = vand.u32 %v75, 4294901760
    %v314 = vsub.f32 %v75, %v313
    %v315 = vand.u32 %v314, 4294901760
    %316 = vmatpush.msra.mxu0 %v315
    %v317 = vand.u32 %v74, 4294901760
    %v318 = vsub.f32 %v74, %v317
    %v319 = vand.u32 %v318, 4294901760
    %320 = vmatpush.msra.mxu0 %v319
    %v321 = vand.u32 %v116, 4294901760
    %322 = vmatmul.f32.gmra.mxu0 %v321
    %v323 = vpop.f32.mrf.mxu0
    %v324 = vadd.f32 %v279, %v323
    %325 = vdwg.mxu0
    %326 = vmatpush.msra.mxu0 0.0
    %327 = vmatpush.msra.mxu0 0.0
    %328 = vmatpush.msra.mxu0 0.0
    %329 = vmatpush.msra.mxu0 0.0
    %330 = vmatpush.msra.mxu0 0.0
    %331 = vmatpush.msra.mxu0 0.0
    %332 = vmatpush.msra.mxu0 0.0
    %333 = vmatpush.msra.mxu0 0.0
    %v334 = vand.u32 %v81, 4294901760
    %335 = vmatpush.msra.mxu0 %v334
    %v336 = vand.u32 %v80, 4294901760
    %337 = vmatpush.msra.mxu0 %v336
    %v338 = vand.u32 %v79, 4294901760
    %339 = vmatpush.msra.mxu0 %v338
    %v340 = vand.u32 %v78, 4294901760
    %341 = vmatpush.msra.mxu0 %v340
    %v342 = vand.u32 %v77, 4294901760
    %343 = vmatpush.msra.mxu0 %v342
    %v344 = vand.u32 %v76, 4294901760
    %345 = vmatpush.msra.mxu0 %v344
    %v346 = vand.u32 %v75, 4294901760
    %347 = vmatpush.msra.mxu0 %v346
    %v348 = vand.u32 %v74, 4294901760
    %349 = vmatpush.msra.mxu0 %v348
    %v350 = vand.u32 %v116, 4294901760
    %351 = vmatmul.f32.gmra.mxu0 %v350
    %v352 = vpop.f32.mrf.mxu0
    %v353 = vadd.f32 %v324, %v352
    %354 = vdwg.mxu0
    %355 = vst [vmem:[#allocation7] sm:$0xff] %v353
    // Predicated region
    $region18: #{tpu_custom_call.1} parent=1 // pred_check
      _
    $region19: #{tpu_custom_call.1} parent=1 // pred_check_branch
      %357 = sbr.rel (0) target = $region21
    $region20: #{tpu_custom_call.1} parent=1 // pred_region
      %359 = vsyncadd [#allocation4], 0
      %s361 = sshll.u32 [#allocation7], 4
      %s362 = int_to_ptr.vmem [resolvable:$true] %s361
      %s363 = sshll.u32 %s2, 4
      %s364 = int_to_ptr.hbm [resolvable:$true] %s363
      %366 = dma.vmem_to_hbm [thread:$0]  %s362, 128, %s364, [#allocation4]
    $region21: #{tpu_custom_call.1} parent=1 // pred_fallthru
      _
    // Predicated region
    $region22: #{tpu_custom_call.1} parent=1 // pred_check
      _
    $region23: #{tpu_custom_call.1} parent=1 // pred_check_branch
      %368 = sbr.rel (0) target = $region25
    $region24: #{tpu_custom_call.1} parent=1 // pred_region
      %370 = dma.done [#allocation4], 128
    $region25: #{tpu_custom_call.1} parent=1 // pred_fallthru
      _
    %371 = vsyncpa [#allocation3], 1
    %372 = vsyncpa [#allocation6], 1
    %373 = vsyncpa [#allocation4], 1

</llo_original>
